<compile_context>
chip_gen: v6e
topology: v6e:2x2x1
jax: 0.10.0
libtpu: 0.0.40
codegen_flags: <defaults>
</compile_context>

<pallas_src>
import functools

import jax
import jax.numpy as jnp
from jax.experimental import pallas as pl
from jax.experimental.pallas import tpu as pltpu


def _round_up(x, m):
    return (x + m - 1) // m * m


def _cdiv(a, b):
    return (a + b - 1) // b


def _tpu_vmem_capacity_bytes():
    try:
        return int(pltpu.get_tpu_info().vmem_capacity_bytes)
    except Exception:
        return 64 * 1024 * 1024        # v7x per-TC size: conservative everywhere


def _vmem_bytes_resident(tb, hp, pp, pc, x_bytes, w_bytes):
    """Per-step VMEM footprint of the resident-W1 (P-chunked) kernel."""
    x_tiles = 2 * tb * hp * x_bytes                     # streamed x tile, double-buffered
    w1_res = hp * pp * w_bytes                          # resident W1, Buffered(1): ONE copy
    rows = 3 * 8 * pp * 4                               # b1 / W2 row / b2, Buffered(1)
    skinny = 2 * 2 * tb * 128 * 4                       # labels + packed output tiles
    h_slab = 3 * tb * pc * 4                            # live hidden slab + VPU temporaries
    return x_tiles + w1_res + rows + skinny + h_slab


def _vmem_bytes_ktiled(tb, tkh, pp, x_bytes, w_bytes):
    """Per-step VMEM footprint of the K-tiled (large-W1) kernel."""
    x_tiles = 2 * tb * tkh * x_bytes
    w1_tiles = 2 * tkh * pp * w_bytes                   # W1 K-slab, double-buffered over K
    acc = tb * pp * 4                                   # f32 pre-activation accumulator
    rows = 3 * 8 * pp * 4
    skinny = 2 * 2 * tb * 128 * 4
    finalize_tmp = 2 * tb * pp * 4                      # relu(acc+b1), h*w2 temporaries
    return x_tiles + w1_tiles + acc + rows + skinny + finalize_tmp


def _prober_kernel_resident(x_ref, w1_ref, b1_ref, w2_ref, b2_ref, y_ref, out_ref,
                            *, batch_size, block_b, p_chunk, n_chunks, cast_bf16):
    """Resident-W1 path: P chunked in-kernel so (TB, Pp) f32 h never materialises."""
    i = pl.program_id(0)
    x = x_ref[...]
    if cast_bf16:
        x = x.astype(jnp.bfloat16)

    def slab(w1c, b1c, w2c, acc):
        if cast_bf16:
            w1c = w1c.astype(jnp.bfloat16)
        # Layer 1 slab on the MXU, f32 accumulation.
        h = jnp.dot(x, w1c, preferred_element_type=jnp.float32)
        h = jnp.maximum(h + b1c, 0.0)
        # Layer 2 (output width 1): VPU multiply + cross-lane reduce; MXU stays free.
        return acc + jnp.sum(h * w2c, axis=-1, keepdims=True)

    acc0 = jnp.zeros((block_b, 1), jnp.float32)
    if n_chunks == 1:
        acc = slab(w1_ref[...], b1_ref[...], w2_ref[...], acc0)
    else:
        def body(c, acc):
            off = pl.multiple_of(c * p_chunk, 128)
            return slab(w1_ref[:, pl.ds(off, p_chunk)],
                        b1_ref[:, pl.ds(off, p_chunk)],
                        w2_ref[:, pl.ds(off, p_chunk)], acc)
        acc = jax.lax.fori_loop(0, n_chunks, body, acc0, unroll=True)

    p = acc + b2_ref[...]                                               # (TB, 1) f32
    # Masked per-row squared error: padded batch rows contribute exactly 0.
    row = jax.lax.broadcasted_iota(jnp.int32, p.shape, 0) + i * block_b
    d = jnp.where(row < batch_size, p - y_ref[...], 0.0)
    out_ref[:, :1] = p                                                  # predictions
    out_ref[:, 1:] = d * d                                              # masked sq.err


def _prober_kernel_ktiled(x_ref, w1_ref, b1_ref, w2_ref, b2_ref, y_ref, out_ref,
                          acc_ref, *, batch_size, block_b, cast_bf16):
    """Large-W1 fallback: W1 tiled over H on an 'arbitrary' K grid axis."""
    i = pl.program_id(0)
    k = pl.program_id(1)

    @pl.when(k == 0)
    def _():
        acc_ref[...] = jnp.zeros_like(acc_ref)

    x = x_ref[...]
    w1 = w1_ref[...]
    if cast_bf16:
        x = x.astype(jnp.bfloat16)
        w1 = w1.astype(jnp.bfloat16)
    acc_ref[...] += jnp.dot(x, w1, preferred_element_type=jnp.float32)

    @pl.when(k == pl.num_programs(1) - 1)
    def _():
        h = jnp.maximum(acc_ref[...] + b1_ref[...], 0.0)
        p = jnp.sum(h * w2_ref[...], axis=-1, keepdims=True) + b2_ref[...]
        row = jax.lax.broadcasted_iota(jnp.int32, p.shape, 0) + i * block_b
        d = jnp.where(row < batch_size, p - y_ref[...], 0.0)
        out_ref[:, :1] = p
        out_ref[:, 1:] = d * d


def mlp_prober_forward(x, labels, w1, b1, w2, b2, *, block_b=1024,
                       cast_to_bf16=False, k_block=None):
    """Returns (loss, predictions), matching MLPProber.forward semantics."""
    B, H = x.shape
    P = w1.shape[1]
    x_bytes = x.dtype.itemsize
    w_bytes = w1.dtype.itemsize
    sub = {4: 8, 2: 16, 1: 32}.get(x_bytes, 8)

    Hp = _round_up(H, 128)
    Pp = _round_up(P, 128)

    # Generation-aware VMEM budget: ~96 MiB usable on v5e/v6e, ~48 MiB on v7x.
    cap = _tpu_vmem_capacity_bytes()
    budget = min(int(cap * 0.75), 100 << 20)
    limit_hi = max(min(cap - (6 << 20), 112 << 20), 16 << 20)

    # In-kernel bf16 cast only applies to f32 matmul operands (never cast in the
    # wrapper: that would cost an extra HBM pass).
    cast_bf16 = bool(cast_to_bf16) and (x.dtype == jnp.float32
                                        or w1.dtype == jnp.float32)

    def _pick_tb(fits_fn):
        # Start from block_b; cap so the grid has >=4 steps (2 per v7x TensorCore)
        # when B is large, with a ~512-row floor; then shrink until VMEM fits.
        tb = min(_round_up(block_b, sub), _round_up(B, sub))
        tb = min(tb, max(_round_up(_cdiv(B, 4), sub), 512))
        while tb > sub and not fits_fn(tb):
            tb = max(sub, _round_up(tb // 2, sub))
        return tb

    # In-kernel P slab: <=512 columns (multiple of both 128- and 256-wide MXUs).
    pc = Pp if Pp <= 512 else 512
    pp_res = _round_up(Pp, pc)
    resident_fits = _vmem_bytes_resident(sub, Hp, pp_res, pc, x_bytes,
                                         w_bytes) <= budget
    use_ktiled = (k_block is not None) or not resident_fits

    if not use_ktiled:
        # ---- Fast path: resident single-buffered W1, P chunked in-kernel ----------
        Pp = pp_res
        n_chunks = Pp // pc
        TB = _pick_tb(lambda tb: _vmem_bytes_resident(
            tb, Hp, Pp, pc, x_bytes, w_bytes) <= budget)
        Bp = _round_up(B, TB)
        grid = (Bp // TB,)
        est = _vmem_bytes_resident(TB, Hp, Pp, pc, x_bytes, w_bytes)

        kernel = functools.partial(
            _prober_kernel_resident, batch_size=B, block_b=TB,
            p_chunk=pc, n_chunks=n_chunks, cast_bf16=cast_bf16)
        in_specs = [
            pl.BlockSpec((TB, Hp), lambda i: (i, 0)),                   # x (pipelined)
            pl.BlockSpec((Hp, Pp), lambda i: (0, 0),
                         pipeline_mode=pl.Buffered(1)),                 # W1 resident
            pl.BlockSpec((1, Pp), lambda i: (0, 0),
                         pipeline_mode=pl.Buffered(1)),                 # b1
            pl.BlockSpec((1, Pp), lambda i: (0, 0),
                         pipeline_mode=pl.Buffered(1)),                 # W2 as a row
            pl.BlockSpec((1, 1), lambda i: (0, 0),
                         pipeline_mode=pl.Buffered(1)),                 # b2
            pl.BlockSpec((TB, 1), lambda i: (i, 0)),                    # labels
        ]
        out_specs = pl.BlockSpec((TB, 2), lambda i: (i, 0))             # [pred, sqerr]
        scratch_shapes = []
        dim_sem = ("parallel",)
    else:
        # ---- Fallback: W1 too big for per-core VMEM -> tile it over H ------------
        TKH = min(512, Hp) if k_block is None else k_block
        TKH = min(max(128, _round_up(TKH, 128)), Hp)
        TB = _pick_tb(lambda tb: _vmem_bytes_ktiled(
            tb, TKH, Pp, x_bytes, w_bytes) <= budget)
        while TKH > 128 and _vmem_bytes_ktiled(TB, TKH, Pp, x_bytes,
                                               w_bytes) > budget:
            TKH = max(128, _round_up(TKH // 2, 128))
        Hp = _round_up(H, TKH)
        Bp = _round_up(B, TB)
        grid = (Bp // TB, Hp // TKH)
        est = _vmem_bytes_ktiled(TB, TKH, Pp, x_bytes, w_bytes)

        kernel = functools.partial(
            _prober_kernel_ktiled, batch_size=B, block_b=TB, cast_bf16=cast_bf16)
        in_specs = [
            pl.BlockSpec((TB, TKH), lambda i, k: (i, k)),               # x tile
            pl.BlockSpec((TKH, Pp), lambda i, k: (k, 0)),               # W1 K-slab
            pl.BlockSpec((1, Pp), lambda i, k: (0, 0),
                         pipeline_mode=pl.Buffered(1)),                 # b1
            pl.BlockSpec((1, Pp), lambda i, k: (0, 0),
                         pipeline_mode=pl.Buffered(1)),                 # W2 as a row
            pl.BlockSpec((1, 1), lambda i, k: (0, 0),
                         pipeline_mode=pl.Buffered(1)),                 # b2
            pl.BlockSpec((TB, 1), lambda i, k: (i, 0)),                 # labels
        ]
        out_specs = pl.BlockSpec((TB, 2), lambda i, k: (i, 0))          # [pred, sqerr]
        scratch_shapes = [pltpu.VMEM((TB, Pp), jnp.float32)]
        dim_sem = ("parallel", "arbitrary")

    def pad2(a, r, c):
        pr, pc_ = r - a.shape[0], c - a.shape[1]
        return a if (pr == 0 and pc_ == 0) else jnp.pad(a, ((0, pr), (0, pc_)))

    # Big operands keep their original dtype (no wrapper upcast / no extra HBM pass);
    # tiny operands go to f32 so all post-matmul VPU math is f32 (v5e-safe).
    xp = pad2(x, Bp, Hp)
    w1p = pad2(w1, Hp, Pp)
    b1p = pad2(b1.reshape(1, P).astype(jnp.float32), 1, Pp)
    w2p = pad2(w2.reshape(1, P).astype(jnp.float32), 1, Pp)    # (P,1) -> (1,Pp) row
    b2p = b2.reshape(1, 1).astype(jnp.float32)
    yp = pad2(labels.reshape(B, 1).astype(jnp.float32), Bp, 1)

    vmem_limit = int(min(max(est + (8 << 20), 32 << 20), limit_hi))
    cost = pl.CostEstimate(
        flops=2 * Bp * Hp * Pp + 4 * Bp * Pp + 4 * Bp,
        transcendentals=0,
        bytes_accessed=(xp.size * xp.dtype.itemsize + w1p.size * w1p.dtype.itemsize
                        + 4 * (b1p.size + w2p.size + b2p.size + yp.size + 2 * Bp)))

    out = pl.pallas_call(
        kernel,
        out_shape=jax.ShapeDtypeStruct((Bp, 2), jnp.float32),   # [:,0]=pred, [:,1]=sqerr
        grid_spec=pltpu.PrefetchScalarGridSpec(
            num_scalar_prefetch=0,
            grid=grid,
            in_specs=in_specs,
            out_specs=out_specs,
            scratch_shapes=scratch_shapes),
        compiler_params=pltpu.CompilerParams(
            dimension_semantics=dim_sem,
            vmem_limit_bytes=vmem_limit),
        cost_estimate=cost,
    )(xp, w1p, b1p, w2p, b2p, yp)

    predictions = out[:B, 0]                  # .squeeze(1) glue
    loss = jnp.sum(out[:, 1]) * (1.0 / B)     # padded rows are exactly 0; 1/B is static
    return loss, predictions


if __name__ == "__main__":
    root = jax.random.PRNGKey(0)
    keys = jax.random.split(root, 24)

    # --- Check 1: tiny f32 prober (B=8, H=32, P=32): resident path, 1 grid step ----
    B, H, P = 8, 32, 32
    x = jax.random.normal(keys[0], (B, H), jnp.float32)
    labels = jax.random.normal(keys[1], (B,), jnp.float32)
    w1 = jax.random.normal(keys[2], (H, P), jnp.float32) / (H ** 0.5)
    b1 = jax.random.normal(keys[3], (P,), jnp.float32) * 0.01
    w2 = jax.random.normal(keys[4], (P, 1), jnp.float32) / (P ** 0.5)
    b2 = jax.random.normal(keys[5], (1,), jnp.float32) * 0.01

    loss, preds = mlp_prober_forward(x, labels, w1, b1, w2, b2)
    jax.block_until_ready((loss, preds))
    h_ref = jnp.maximum(x @ w1 + b1, 0.0)
    p_ref = (h_ref @ w2 + b2)[:, 0]
    loss_ref = jnp.mean((p_ref - labels) ** 2)
    assert preds.shape == (B,)
    assert jnp.allclose(preds, p_ref, atol=1e-5, rtol=1e-5)
    assert jnp.allclose(loss, loss_ref, atol=1e-5, rtol=1e-5)

    # --- Check 2: bf16, non-aligned shapes, multi-step grid + batch masking --------
    B2, H2, P2 = 300, 96, 40
    x2 = jax.random.normal(keys[6], (B2, H2), jnp.float32).astype(jnp.bfloat16)
    y2 = jax.random.normal(keys[7], (B2,), jnp.float32)
    w1b = (jax.random.normal(keys[8], (H2, P2), jnp.float32) / (H2 ** 0.5)).astype(jnp.bfloat16)
    b1b = jax.random.normal(keys[9], (P2,), jnp.float32) * 0.01
    w2b = jax.random.normal(keys[10], (P2, 1), jnp.float32) / (P2 ** 0.5)
    b2b = jax.random.normal(keys[11], (1,), jnp.float32) * 0.01

    loss2, preds2 = mlp_prober_forward(x2, y2, w1b, b1b, w2b, b2b, block_b=128)
    jax.block_until_ready((loss2, preds2))
    h2_ref = jnp.maximum(x2.astype(jnp.float32) @ w1b.astype(jnp.float32) + b1b, 0.0)
    p2_ref = (h2_ref @ w2b + b2b)[:, 0]
    loss2_ref = jnp.mean((p2_ref - y2) ** 2)
    assert preds2.shape == (B2,)
    assert jnp.allclose(preds2, p2_ref, atol=1e-2, rtol=1e-2)
    assert jnp.allclose(loss2, loss2_ref, atol=1e-2, rtol=1e-2)

    # --- Check 3: f32, P > 512 -> exercises the in-kernel P-chunk fori_loop --------
    B3, H3, P3 = 100, 64, 600
    x3 = jax.random.normal(keys[12], (B3, H3), jnp.float32)
    y3 = jax.random.normal(keys[13], (B3,), jnp.float32)
    w1c = jax.random.normal(keys[14], (H3, P3), jnp.float32) / (H3 ** 0.5)
    b1c = jax.random.normal(keys[15], (P3,), jnp.float32) * 0.01
    w2c = jax.random.normal(keys[16], (P3, 1), jnp.float32) / (P3 ** 0.5)
    b2c = jax.random.normal(keys[17], (1,), jnp.float32) * 0.01

    loss3, preds3 = mlp_prober_forward(x3, y3, w1c, b1c, w2c, b2c, block_b=64)
    jax.block_until_ready((loss3, preds3))
    h3_ref = jnp.maximum(x3 @ w1c + b1c, 0.0)
    p3_ref = (h3_ref @ w2c + b2c)[:, 0]
    loss3_ref = jnp.mean((p3_ref - y3) ** 2)
    assert jnp.allclose(preds3, p3_ref, atol=1e-4, rtol=1e-4)
    assert jnp.allclose(loss3, loss3_ref, atol=1e-4, rtol=1e-4)

    # --- Check 4: forced K-tiled fallback (large-W1 path) over H --------------------
    B4, H4, P4 = 260, 200, 70
    x4 = jax.random.normal(keys[18], (B4, H4), jnp.float32)
    y4 = jax.random.normal(keys[19], (B4,), jnp.float32)
    w1d = jax.random.normal(keys[20], (H4, P4), jnp.float32) / (H4 ** 0.5)
    b1d = jax.random.normal(keys[21], (P4,), jnp.float32) * 0.01
    w2d = jax.random.normal(keys[22], (P4, 1), jnp.float32) / (P4 ** 0.5)
    b2d = jax.random.normal(keys[23], (1,), jnp.float32) * 0.01

    loss4, preds4 = mlp_prober_forward(x4, y4, w1d, b1d, w2d, b2d,
                                       block_b=64, k_block=128)
    jax.block_until_ready((loss4, preds4))
    h4_ref = jnp.maximum(x4 @ w1d + b1d, 0.0)
    p4_ref = (h4_ref @ w2d + b2d)[:, 0]
    loss4_ref = jnp.mean((p4_ref - y4) ** 2)
    assert jnp.allclose(preds4, p4_ref, atol=1e-4, rtol=1e-4)
    assert jnp.allclose(loss4, loss4_ref, atol=1e-4, rtol=1e-4)

    # --- Check 5: in-kernel bf16 cast of f32 operands (v6e/v7x MXU-rate path) ------
    loss5, preds5 = mlp_prober_forward(x, labels, w1, b1, w2, b2, cast_to_bf16=True)
    jax.block_until_ready((loss5, preds5))
    assert jnp.allclose(preds5, p_ref, atol=5e-2, rtol=5e-2)
    assert jnp.allclose(loss5, loss_ref, atol=5e-2, rtol=5e-2)

    print("KERNEL_OK")
</pallas_src>

<mosaic_0001>
module attributes {stable_mosaic.version = 11 : i64} {
  func.func @_prober_kernel_resident(%arg0: i32, %arg1: memref<8x128xf32, #tpu.memory_space<vmem>>, %arg2: memref<128x128xf32, #tpu.memory_space<vmem>>, %arg3: memref<1x128xf32, #tpu.memory_space<vmem>>, %arg4: memref<1x128xf32, #tpu.memory_space<vmem>>, %arg5: memref<1x1xf32, #tpu.memory_space<vmem>>, %arg6: memref<8x1xf32, #tpu.memory_space<vmem>>, %arg7: memref<8x2xf32, #tpu.memory_space<vmem>>) attributes {dimension_semantics = [#tpu.dimension_semantics<parallel>], iteration_bounds = array<i64: 1>, scalar_prefetch = 0 : i64, scratch_operands = 0 : i64, tpu.core_type = #tpu.core_type<tc>, window_params = [{transform_indices = @transform_0, window_bounds = array<i64: 8, 128>}, {pipeline_mode = #tpu.pipeline_mode<synchronous>, transform_indices = @transform_1, window_bounds = array<i64: 128, 128>}, {pipeline_mode = #tpu.pipeline_mode<synchronous>, transform_indices = @transform_2, window_bounds = array<i64: 1, 128>}, {pipeline_mode = #tpu.pipeline_mode<synchronous>, transform_indices = @transform_3, window_bounds = array<i64: 1, 128>}, {pipeline_mode = #tpu.pipeline_mode<synchronous>, transform_indices = @transform_4, window_bounds = array<i64: 1, 1>}, {transform_indices = @transform_5, window_bounds = array<i64: 8, 1>}, {transform_indices = @transform_6, window_bounds = array<i64: 8, 2>}]} {
    %c0 = arith.constant 0 : index
    %c0_0 = arith.constant 0 : index
    %0 = vector.load %arg1[%c0, %c0_0] : memref<8x128xf32, #tpu.memory_space<vmem>>, vector<8x128xf32>
    %cst = arith.constant 0.000000e+00 : f32
    %1 = vector.broadcast %cst : f32 to vector<8x1xf32>
    %c0_1 = arith.constant 0 : index
    %c0_2 = arith.constant 0 : index
    %2 = vector.load %arg2[%c0_1, %c0_2] : memref<128x128xf32, #tpu.memory_space<vmem>>, vector<128x128xf32>
    %c0_3 = arith.constant 0 : index
    %c0_4 = arith.constant 0 : index
    %3 = vector.load %arg3[%c0_3, %c0_4] : memref<1x128xf32, #tpu.memory_space<vmem>>, vector<1x128xf32>
    %c0_5 = arith.constant 0 : index
    %c0_6 = arith.constant 0 : index
    %4 = vector.load %arg4[%c0_5, %c0_6] : memref<1x128xf32, #tpu.memory_space<vmem>>, vector<1x128xf32>
    %cst_7 = arith.constant dense<0.000000e+00> : vector<8x128xf32>
    %5 = tpu.matmul %0, %2, %cst_7 {dimension_numbers = #tpu.dot_dimension_numbers<[1], [0], [0], [1], [0, 0, 1, 1], [], []>} : vector<8x128xf32>, vector<128x128xf32>, vector<8x128xf32> -> vector<8x128xf32>
    %6 = vector.broadcast %3 : vector<1x128xf32> to vector<8x128xf32>
    %7 = arith.addf %5, %6 : vector<8x128xf32>
    %cst_8 = arith.constant 0.000000e+00 : f32
    %8 = vector.broadcast %cst_8 : f32 to vector<8x128xf32>
    %9 = arith.maximumf %7, %8 : vector<8x128xf32>
    %10 = vector.broadcast %4 : vector<1x128xf32> to vector<8x128xf32>
    %11 = arith.mulf %9, %10 : vector<8x128xf32>
    %cst_9 = arith.constant dense<0.000000e+00> : vector<8xf32>
    %12 = vector.multi_reduction <add>, %11, %cst_9 [1] : vector<8x128xf32> to vector<8xf32>
    %13 = vector.shape_cast %12 : vector<8xf32> to vector<8x1xf32>
    %14 = arith.addf %1, %13 : vector<8x1xf32>
    %c0_10 = arith.constant 0 : index
    %c0_11 = arith.constant 0 : index
    %15 = vector.load %arg5[%c0_10, %c0_11] : memref<1x1xf32, #tpu.memory_space<vmem>>, vector<1x1xf32>
    %16 = vector.broadcast %15 : vector<1x1xf32> to vector<8x1xf32>
    %17 = arith.addf %14, %16 : vector<8x1xf32>
    %18 = tpu.iota {dimensions = array<i32: 0>} : vector<8x1xi32>
    %c8_i32 = arith.constant 8 : i32
    %19 = arith.muli %arg0, %c8_i32 : i32
    %20 = vector.broadcast %19 : i32 to vector<8x1xi32>
    %21 = arith.addi %18, %20 : vector<8x1xi32>
    %c8_i32_12 = arith.constant 8 : i32
    %22 = vector.broadcast %c8_i32_12 : i32 to vector<8x1xi32>
    %23 = arith.cmpi slt, %21, %22 : vector<8x1xi32>
    %c0_13 = arith.constant 0 : index
    %c0_14 = arith.constant 0 : index
    %24 = vector.load %arg6[%c0_13, %c0_14] : memref<8x1xf32, #tpu.memory_space<vmem>>, vector<8x1xf32>
    %25 = arith.subf %17, %24 : vector<8x1xf32>
    %cst_15 = arith.constant 0.000000e+00 : f32
    %26 = vector.broadcast %cst_15 : f32 to vector<8x1xf32>
    %27 = arith.select %23, %25, %26 : vector<8x1xi1>, vector<8x1xf32>
    %c0_16 = arith.constant 0 : index
    %c0_17 = arith.constant 0 : index
    %28 = vector.load %arg7[%c0_16, %c0_17] : memref<8x2xf32, #tpu.memory_space<vmem>>, vector<8x1xf32>
    tpu.vector_store %arg7[%c0_16, %c0_17], %17 {strides = array<i32>} : memref<8x2xf32, #tpu.memory_space<vmem>>, vector<8x1xf32>,
    %29 = arith.mulf %27, %27 : vector<8x1xf32>
    %c0_18 = arith.constant 0 : index
    %c1 = arith.constant 1 : index
    %30 = vector.load %arg7[%c0_18, %c1] : memref<8x2xf32, #tpu.memory_space<vmem>>, vector<8x1xf32>
    tpu.vector_store %arg7[%c0_18, %c1], %29 {strides = array<i32>} : memref<8x2xf32, #tpu.memory_space<vmem>>, vector<8x1xf32>,
    return
  }
  func.func @transform_0(%arg0: i32) -> (i32, i32) {
    %c0_i32 = arith.constant 0 : i32
    %c0_i32_0 = arith.constant 0 : i32
    return %arg0, %c0_i32 : i32, i32
  }
  func.func @transform_1(%arg0: i32) -> (i32, i32) {
    %c0_i32 = arith.constant 0 : i32
    %c0_i32_0 = arith.constant 0 : i32
    %c0_i32_1 = arith.constant 0 : i32
    return %c0_i32, %c0_i32_0 : i32, i32
  }
  func.func @transform_2(%arg0: i32) -> (i32, i32) {
    %c0_i32 = arith.constant 0 : i32
    %c0_i32_0 = arith.constant 0 : i32
    %c0_i32_1 = arith.constant 0 : i32
    return %c0_i32, %c0_i32_0 : i32, i32
  }
  func.func @transform_3(%arg0: i32) -> (i32, i32) {
    %c0_i32 = arith.constant 0 : i32
    %c0_i32_0 = arith.constant 0 : i32
    %c0_i32_1 = arith.constant 0 : i32
    return %c0_i32, %c0_i32_0 : i32, i32
  }
  func.func @transform_4(%arg0: i32) -> (i32, i32) {
    %c0_i32 = arith.constant 0 : i32
    %c0_i32_0 = arith.constant 0 : i32
    %c0_i32_1 = arith.constant 0 : i32
    return %c0_i32, %c0_i32_0 : i32, i32
  }
  func.func @transform_5(%arg0: i32) -> (i32, i32) {
    %c0_i32 = arith.constant 0 : i32
    %c0_i32_0 = arith.constant 0 : i32
    return %arg0, %c0_i32 : i32, i32
  }
  func.func @transform_6(%arg0: i32) -> (i32, i32) {
    %c0_i32 = arith.constant 0 : i32
    %c0_i32_0 = arith.constant 0 : i32
    return %arg0, %c0_i32 : i32, i32
  }
}

</mosaic_0001>

<llo_original>
// kernel: tpu_custom_call.1
$region0: #{tpu_custom_call.1}
  #allocation0 [shape = 'u32[]', space=smem, size = 0x4, offset = 0x4, fixed_abs, tag = 'smem constant byte address 0x4 - core index']
  #allocation1 [shape = 'u32[144,128]{1,0:T(1,128)}', space=vmem, size = 0x12000, scoped, tag = 'internal scratch']
  #allocation2 [shape = 'f32[1,1]{1,0:T(1,128)S(1)}', space=vmem, size = 0x200, scoped, tag = 'scoped memory for tpu_custom_call.1']
  %s0 = inlined_call_operand.vmem [shape: f32[8,128], index: 0, kind: input, shape index: {}]
  %s1 = inlined_call_operand.hbm [shape: f32[128,128], index: 1, kind: input, shape index: {}]
  %s2 = inlined_call_operand.vmem [shape: f32[1,128], index: 2, kind: input, shape index: {}]
  %s3 = inlined_call_operand.vmem [shape: f32[1,128], index: 3, kind: input, shape index: {}]
  %s4 = inlined_call_operand.<no memory space> [shape: f32[1,1], index: 4, kind: input, shape index: {}]
  %s5 = inlined_call_operand.vmem [shape: f32[8,1], index: 5, kind: input, shape index: {}]
  %s6 = inlined_call_operand.vmem [shape: f32[8,2], index: 6, kind: output, shape index: {}]
  %s7 = sld [smem:[#allocation0]]
  $region38: #{tpu_custom_call.1} parent=0
    _
  %s9 = ssub.s32 1, %s7
  %s10 = scalar_select 0, %s9, %s7
  %v11 = vstv %s4
  %12 = vst [vmem:[#allocation2] sm:$0x1] %v11
  $region1: #{tpu_custom_call.1} parent=0
    #allocation3 [shape = 'u8[65536]{0}', space=vmem, size = 0x10000, scoped, tag = 'input window, operand 1, single buffered']
    #allocation4 [shape = 's32[1]{0}', space=sflag, size = 0x4, scoped, tag = 'scoped memory for tpu_custom_call.1']
    %13 = vsyncpa [#allocation4], 0
    // Predicated region
    $region2: #{tpu_custom_call.1} parent=1 // pred_check
      _
    $region3: #{tpu_custom_call.1} parent=1 // pred_check_branch
      %15 = sbr.rel (0) target = $region5
    $region4: #{tpu_custom_call.1} parent=1 // pred_region
      _
    $region5: #{tpu_custom_call.1} parent=1 // pred_fallthru
      _
    // Predicated region
    $region6: #{tpu_custom_call.1} parent=1 // pred_check
      _
    $region7: #{tpu_custom_call.1} parent=1 // pred_check_branch
      %17 = sbr.rel (0) target = $region9
    $region8: #{tpu_custom_call.1} parent=1 // pred_region
      %s19 = ssub.s32 2048, 2048
      %20 = vsyncadd [#allocation4], %s19
      %s21 = sshll.u32 [#allocation3], 4
      %s22 = int_to_ptr.vmem [resolvable:$true] %s21
      %27 = dma.hbm_to_vmem [thread:$0]  %s1, 2048, %s22, [#allocation4], 128, 128, 8
    $region9: #{tpu_custom_call.1} parent=1 // pred_fallthru
      _
    // Predicated region
    $region10: #{tpu_custom_call.1} parent=1 // pred_check
      _
    $region11: #{tpu_custom_call.1} parent=1 // pred_check_branch
      %29 = sbr.rel (0) target = $region13
    $region12: #{tpu_custom_call.1} parent=1 // pred_region
      _
    $region13: #{tpu_custom_call.1} parent=1 // pred_fallthru
      _
    // Predicated region
    $region14: #{tpu_custom_call.1} parent=1 // pred_check
      _
    $region15: #{tpu_custom_call.1} parent=1 // pred_check_branch
      %31 = sbr.rel (0) target = $region17
    $region16: #{tpu_custom_call.1} parent=1 // pred_region
      _
    $region17: #{tpu_custom_call.1} parent=1 // pred_fallthru
      _
    // Predicated region
    $region18: #{tpu_custom_call.1} parent=1 // pred_check
      _
    $region19: #{tpu_custom_call.1} parent=1 // pred_check_branch
      %33 = sbr.rel (0) target = $region21
    $region20: #{tpu_custom_call.1} parent=1 // pred_region
      _
    $region21: #{tpu_custom_call.1} parent=1 // pred_fallthru
      _
    // Predicated region
    $region22: #{tpu_custom_call.1} parent=1 // pred_check
      _
    $region23: #{tpu_custom_call.1} parent=1 // pred_check_branch
      %35 = sbr.rel (0) target = $region25
    $region24: #{tpu_custom_call.1} parent=1 // pred_region
      _
    $region25: #{tpu_custom_call.1} parent=1 // pred_fallthru
      _
    // Predicated region
    $region26: #{tpu_custom_call.1} parent=1 // pred_check
      _
    $region27: #{tpu_custom_call.1} parent=1 // pred_check_branch
      %37 = sbr.rel (0) target = $region29
    $region28: #{tpu_custom_call.1} parent=1 // pred_region
      %38 = dma.done [#allocation4], 2048
    $region29: #{tpu_custom_call.1} parent=1 // pred_fallthru
      _
    %v39 = vld [vmem:[%s0] sm:$0xff]
    %v40 = vld [vmem:[#allocation3] sm:$0xff]
    %v41 = vld [vmem:[#allocation3 + $0x8] sm:$0xff]
    %v42 = vld [vmem:[#allocation3 + $0x10] sm:$0xff]
    %v43 = vld [vmem:[#allocation3 + $0x18] sm:$0xff]
    %v44 = vld [vmem:[#allocation3 + $0x20] sm:$0xff]
    %v45 = vld [vmem:[#allocation3 + $0x28] sm:$0xff]
    %v46 = vld [vmem:[#allocation3 + $0x30] sm:$0xff]
    %v47 = vld [vmem:[#allocation3 + $0x38] sm:$0xff]
    %v48 = vld [vmem:[#allocation3 + $0x40] sm:$0xff]
    %v49 = vld [vmem:[#allocation3 + $0x48] sm:$0xff]
    %v50 = vld [vmem:[#allocation3 + $0x50] sm:$0xff]
    %v51 = vld [vmem:[#allocation3 + $0x58] sm:$0xff]
    %v52 = vld [vmem:[#allocation3 + $0x60] sm:$0xff]
    %v53 = vld [vmem:[#allocation3 + $0x68] sm:$0xff]
    %v54 = vld [vmem:[#allocation3 + $0x70] sm:$0xff]
    %v55 = vld [vmem:[#allocation3 + $0x78] sm:$0xff]
    %v56 = vld [vmem:[%s2] sm:$0x1]
    %v57 = vld [vmem:[%s3] sm:$0x1]
    %v59 = vlaneseq
    %v60 = vshrl.u32 %v59, 7
    %v61 = vsub.s32 0, %v60
    %v62 = vrot.slane %v56, %v61
    %64 = vmatprep.subr.mxu0 0.0
    %65 = vmatpush1.msra.mxu0 %v55
    %66 = vmatprep.subr.mxu0 0.0
    %67 = vmatpush1.msra.mxu0 %v54
    %68 = vmatprep.subr.mxu0 0.0
    %69 = vmatpush1.msra.mxu0 %v53
    %70 = vmatprep.subr.mxu0 0.0
    %71 = vmatpush1.msra.mxu0 %v52
    %72 = vmatprep.subr.mxu0 0.0
    %73 = vmatpush1.msra.mxu0 %v51
    %74 = vmatprep.subr.mxu0 0.0
    %75 = vmatpush1.msra.mxu0 %v50
    %76 = vmatprep.subr.mxu0 0.0
    %77 = vmatpush1.msra.mxu0 %v49
    %78 = vmatprep.subr.mxu0 0.0
    %79 = vmatpush1.msra.mxu0 %v48
    %80 = vmatprep.subr.mxu0 0.0
    %81 = vmatpush1.msra.mxu0 %v47
    %82 = vmatprep.subr.mxu0 0.0
    %83 = vmatpush1.msra.mxu0 %v46
    %84 = vmatprep.subr.mxu0 0.0
    %85 = vmatpush1.msra.mxu0 %v45
    %86 = vmatprep.subr.mxu0 0.0
    %87 = vmatpush1.msra.mxu0 %v44
    %88 = vmatprep.subr.mxu0 0.0
    %89 = vmatpush1.msra.mxu0 %v43
    %90 = vmatprep.subr.mxu0 0.0
    %91 = vmatpush1.msra.mxu0 %v42
    %92 = vmatprep.subr.mxu0 0.0
    %93 = vmatpush1.msra.mxu0 %v41
    %94 = vmatprep.subr.mxu0 0.0
    %95 = vmatpush1.msra.mxu0 %v40
    %96 = vmatprep.subr.mxu0 0.0
    %97 = vmatpush2.msra.mxu0 0.0
    %98 = vmatprep.subr.mxu0 0.0
    %99 = vmatpush2.msra.mxu0 0.0
    %100 = vmatprep.subr.mxu0 0.0
    %101 = vmatpush2.msra.mxu0 0.0
    %102 = vmatprep.subr.mxu0 0.0
    %103 = vmatpush2.msra.mxu0 0.0
    %104 = vmatprep.subr.mxu0 0.0
    %105 = vmatpush2.msra.mxu0 0.0
    %106 = vmatprep.subr.mxu0 0.0
    %107 = vmatpush2.msra.mxu0 0.0
    %108 = vmatprep.subr.mxu0 0.0
    %109 = vmatpush2.msra.mxu0 0.0
    %110 = vmatprep.subr.mxu0 0.0
    %111 = vmatpush2.msra.mxu0 0.0
    %112 = vmatprep.subr.mxu0 0.0
    %113 = vmatpush2.msra.mxu0 0.0
    %114 = vmatprep.subr.mxu0 0.0
    %115 = vmatpush2.msra.mxu0 0.0
    %116 = vmatprep.subr.mxu0 0.0
    %117 = vmatpush2.msra.mxu0 0.0
    %118 = vmatprep.subr.mxu0 0.0
    %119 = vmatpush2.msra.mxu0 0.0
    %120 = vmatprep.subr.mxu0 0.0
    %121 = vmatpush2.msra.mxu0 0.0
    %122 = vmatprep.subr.mxu0 0.0
    %123 = vmatpush2.msra.mxu0 0.0
    %124 = vmatprep.subr.mxu0 0.0
    %125 = vmatpush2.msra.mxu0 0.0
    %126 = vmatprep.subr.mxu0 0.0
    %127 = vmatpush2.msra.mxu0 0.0
    %128 = vmatprep.mubr.f32.mxu0 0.0
    %129 = vmatmul.mubr.f32.gmra.mxu0 %v39
    %v130 = vpop.f32.mrf.mxu0
    %v131 = vadd.f32 %v62, %v130
    %v132 = vpop.f32.mrf.mxu0
    %133 = vdwg.mxu0
    %v134 = vmax.f32 %v131, 0.0
    %v136 = vlaneseq
    %v137 = vshrl.u32 %v136, 7
    %v138 = vsub.s32 0, %v137
    %v139 = vrot.slane %v57, %v138
    %v141 = vmul.f32 %v134, %v139
    %142 = vadd.xlane.f32.xlu0 %v141
    %v143 = vpop.xlane.xlu0 %142
    %v144 = vadd.f32 %v143, 0.0
    %v145 = vld [vmem:[#allocation2] sm:$0x1]
    %v147 = vlaneseq
    %v148 = vshrl.u32 %v147, 7
    %v149 = vsub.s32 0, %v148
    %v150 = vrot.slane %v145, %v149
    %v152 = vadd.f32 %v144, %v150
    %v153 = vlaneseq
    %v154 = vshrl.u32 %v153, 7
    %s155 = smul.u32 0, 8
    %v156 = vstv %s155
    %v157 = vadd.s32 %v154, %v156
    %vm158 = vcmp.lt.s32.totalorder %v157, 8
    %v159 = vld [vmem:[%s5] sm:$0xff]
    %v160 = vsub.f32 %v152, %v159
    %v161 = vsel %vm158, %v160, 0.0
    %vm162 = vcmask 7168
    %163 = vst.msk [vmem:[%s6] sm:$0xff] %vm162, %v152
    %v164 = vmul.f32 %v161, %v161
    %166 = vrot.lane.b32.xlu0 %v164, 1
    %v167 = vpop.permute.xlu0 %166
    %vm169 = vcmask 15368
    %170 = vst.msk [vmem:[%s6] sm:$0xff] %vm169, %v167
    // Predicated region
    $region30: #{tpu_custom_call.1} parent=1 // pred_check
      _
    $region31: #{tpu_custom_call.1} parent=1 // pred_check_branch
      %172 = sbr.rel (0) target = $region33
    $region32: #{tpu_custom_call.1} parent=1 // pred_region
      _
    $region33: #{tpu_custom_call.1} parent=1 // pred_fallthru
      _
    // Predicated region
    $region34: #{tpu_custom_call.1} parent=1 // pred_check
      _
    $region35: #{tpu_custom_call.1} parent=1 // pred_check_branch
      %174 = sbr.rel (0) target = $region37
    $region36: #{tpu_custom_call.1} parent=1 // pred_region
      _
    $region37: #{tpu_custom_call.1} parent=1 // pred_fallthru
      _
    %175 = vsyncpa [#allocation4], 1

</llo_original>
